<compile_context>
chip_gen: v7x
topology: tpu7x:2x2x1
jax: 0.10.0
libtpu: 0.0.40
codegen_flags: <defaults>
</compile_context>

<pallas_src>
import math
import functools

import jax
import jax.numpy as jnp
from jax import lax
from jax.experimental import pallas as pl
from jax.experimental.pallas import tpu as pltpu


def _ensemble_decoder_kernel(h_ref, w_ref, b_ref, attn_ref,      # inputs
                             probs_out, attn_out,                # outputs
                             p_sc, tmax_sc, m_sc, s_sc,          # scratch
                             *, num_models, num_v_tiles, tv, unroll_finalize):
    m = pl.program_id(0)   # model index (outer)
    v = pl.program_id(1)   # vocab tile index (inner)

    # ---- one-time init of the resident output accumulators -------------------
    @pl.when((m == 0) & (v == 0))
    def _init_outputs():
        probs_out[...] = jnp.zeros_like(probs_out)
        attn_out[...] = jnp.zeros_like(attn_out)

    # ---- per-model init of the online-softmax state ---------------------------
    @pl.when(v == 0)
    def _init_model():
        m_sc[...] = jnp.full_like(m_sc, -jnp.inf)
        s_sc[...] = jnp.zeros_like(s_sc)

    # ---- logits for this (model, vocab tile) ----------------------------------
    # temperature is already folded into h and bias by the wrapper.
    logits = jnp.dot(h_ref[...], w_ref[...],
                     preferred_element_type=jnp.float32) + b_ref[...]   # (B, TV) f32

    # ---- flash-style online max / sum-of-exp over vocab tiles -----------------
    # one exp per element; exp(logits - running_max) is stashed (possibly in
    # bf16) and rescaled by a per-row factor at the per-model finalize.
    tile_max = jnp.max(logits, axis=-1, keepdims=True)            # (B, 1)
    new_max = jnp.maximum(m_sc[...], tile_max)                    # (B, 1)
    e = jnp.exp(logits - new_max)                                 # (B, TV) f32
    s_sc[...] = s_sc[...] * jnp.exp(m_sc[...] - new_max) + jnp.sum(
        e, axis=-1, keepdims=True)                                # f32 running sum
    m_sc[...] = new_max
    p_sc[v] = e.astype(p_sc.dtype)
    tmax_sc[v] = new_max

    tiny = 1.1754943508222875e-38     # float32 tiny: floors the final log at ~-87.3
    log_m = math.log(num_models)

    def _finalize(apply_ensemble_log):
        # Rescale the stashed tiles by exp(tile_max - final_max) / s and
        # accumulate sum-of-softmax into the resident output.  For the last
        # model the ensemble log / -log(M) is fused per tile so there is no
        # extra full-(B,V) pass in the un-overlapped tail.
        final_max = m_sc[...]                                     # (B, 1)
        inv_s = 1.0 / s_sc[...]                                   # (B, 1)

        def tile_update(j, off):
            scale = jnp.exp(tmax_sc[j] - final_max) * inv_s       # (B, 1)
            acc = (probs_out[:, pl.ds(off, tv)]
                   + p_sc[j].astype(jnp.float32) * scale)         # (B, TV)
            if apply_ensemble_log:
                acc = jnp.log(jnp.maximum(acc, tiny)) - log_m
            probs_out[:, pl.ds(off, tv)] = acc

        if unroll_finalize:
            for j in range(num_v_tiles):                          # static unroll (small nv)
                tile_update(j, j * tv)
        else:
            def body(j, carry):                                   # large nv: bounded code size
                tile_update(j, pl.multiple_of(j * tv, tv))
                return carry
            lax.fori_loop(0, num_v_tiles, body, 0)

    # ---- per-model finalize: accumulate softmax probs into the outputs --------
    @pl.when((v == num_v_tiles - 1) & (m < num_models - 1))
    def _finish_model():
        _finalize(apply_ensemble_log=False)
        attn_out[...] += attn_ref[...]

    # ---- last model: per-model finalize fused with the ensemble finalize ------
    @pl.when((v == num_v_tiles - 1) & (m == num_models - 1))
    def _finish_last_model():
        _finalize(apply_ensemble_log=True)
        attn_out[...] = (attn_out[...] + attn_ref[...]) * (1.0 / num_models)


def _vmem_capacity_bytes():
    try:
        return int(pltpu.get_tpu_info().vmem_capacity_bytes)
    except Exception:
        return 64 * 1024 * 1024   # conservative fallback (v7x per-TC VMEM)


def _plan_tiles(V, H, B, S, w_itemsize, h_itemsize, vmem_budget, w_buffers,
                tv=None, stash_dtype=None):
    """Pick the vocab tile (largest multiple of 128 dividing V whose W buffers
    fit ~1/3 of the VMEM budget), the exp-stash dtype, and the VMEM limit."""
    if tv is None:
        tv = 128
        for cand in range(128, V + 1, 128):
            if V % cand:
                continue
            if w_buffers * H * cand * w_itemsize <= vmem_budget // 3:
                tv = cand
    nv = max(V // tv, 1)
    pb = -(-B // 16) * 16                                # conservative sublane pad

    def _estimate(stash_bytes):
        return (w_buffers * H * tv * w_itemsize          # W tiles (deep-buffered)
                + w_buffers * 8 * tv * 4                 # bias tiles (sublane-padded)
                + 2 * pb * H * h_itemsize                # h (double-buffered)
                + 2 * pb * S * 4                         # attn (double-buffered)
                + pb * V * 4                             # resident probs output
                + pb * S * 4                             # resident attn output
                + pb * V * stash_bytes                   # p_sc exp stash
                + (nv + 2) * pb * 128 * 4)               # tmax / max / sum (lane-padded)

    if stash_dtype is None:
        stash_dtype = jnp.float32
        if _estimate(4) > int(0.85 * vmem_budget):
            stash_dtype = jnp.bfloat16                   # halves the second (B,V) slab
    stash_bytes = jnp.dtype(stash_dtype).itemsize
    vmem_limit = int(min(vmem_budget,
                         max(int(1.3 * _estimate(stash_bytes)) + (2 << 20),
                             16 << 20)))
    return tv, nv, stash_dtype, vmem_limit


def _maybe_buffered_spec(block_shape, index_map, buffer_count):
    """BlockSpec with deeper pipelining when supported (hides the per-model
    finalize bubble behind extra in-flight W DMAs)."""
    if buffer_count is not None and buffer_count > 2:
        try:
            return pl.BlockSpec(block_shape, index_map,
                                pipeline_mode=pl.Buffered(buffer_count))
        except Exception:
            pass
    return pl.BlockSpec(block_shape, index_map)


def ensemble_forward_decoder(tokens, embeds, w_out, b_out, attn,
                             temperature=1.0, tv=None, stash_dtype=None,
                             unroll_finalize=None, w_buffers=3):
    """Pallas-backed EnsembleModel.forward_decoder.

    tokens : (B, T) int32 token ids
    embeds : (M, vocab, H) per-model embedding tables  (store bf16 at model load)
    w_out  : (M, H, V)     per-model output projections (store bf16 at model load)
    b_out  : (M, 1, V)     per-model output biases
    attn   : (M, B, T, S)  per-model attention (last step extracted)
    Returns (avg_log_probs (B, V) f32, avg_attn (B, S) f32).

    Weights are consumed in the dtype they are stored in — no per-call cast of
    the HBM-bound W stream happens here.
    """
    M, _, H = embeds.shape
    V = w_out.shape[-1]
    B = tokens.shape[0]
    S = attn.shape[-1]

    # ---- glue (plain JAX): last-token gather, last-step attention, temperature
    inv_t = float(1.0 / temperature)
    last_tok = tokens[:, -1]                                      # (B,)
    h = jnp.take(embeds, last_tok, axis=1)                        # (M, B, H), embeds dtype
    if inv_t != 1.0:
        h = h * inv_t                 # folded once into the fresh per-call gather
    b = b_out.astype(jnp.float32)                                 # (M, 1, V)
    if inv_t != 1.0:
        b = b * inv_t                 # tiny vs the W stream (V vs H*V per model)
    attn_last = attn[:, :, -1, :].astype(jnp.float32)             # (M, B, S)

    w_itemsize = jnp.dtype(w_out.dtype).itemsize
    h_itemsize = jnp.dtype(h.dtype).itemsize

    vmem_budget = int(0.8 * _vmem_capacity_bytes())   # headroom for compiler scratch
    tv, nv, stash_dtype, vmem_limit = _plan_tiles(
        V, H, B, S, w_itemsize, h_itemsize, vmem_budget, w_buffers,
        tv=tv, stash_dtype=stash_dtype)
    assert V % 128 == 0 and tv % 128 == 0 and V % tv == 0, (V, tv)
    if unroll_finalize is None:
        unroll_finalize = nv <= 8

    kernel = functools.partial(
        _ensemble_decoder_kernel,
        num_models=int(M),                          # plain Python ints/floats only
        num_v_tiles=int(nv),
        tv=int(tv),
        unroll_finalize=bool(unroll_finalize),
    )

    def _run(use_deep_buffering):
        nbuf = w_buffers if use_deep_buffering else None
        grid_spec = pltpu.PrefetchScalarGridSpec(
            num_scalar_prefetch=0,
            grid=(M, nv),                           # model axis outer, vocab tiles inner
            in_specs=[
                pl.BlockSpec((pl.Squeezed(), B, H), lambda m, v: (m, 0, 0)),       # h
                _maybe_buffered_spec((pl.Squeezed(), H, tv),
                                     lambda m, v: (m, 0, v), nbuf),                # W tile
                _maybe_buffered_spec((pl.Squeezed(), 1, tv),
                                     lambda m, v: (m, 0, v), nbuf),                # bias tile
                pl.BlockSpec((pl.Squeezed(), B, S), lambda m, v: (m, 0, 0)),       # attn
            ],
            out_specs=[
                pl.BlockSpec((B, V), lambda m, v: (0, 0)),   # avg log-probs (resident)
                pl.BlockSpec((B, S), lambda m, v: (0, 0)),   # avg attention (resident)
            ],
            scratch_shapes=[
                pltpu.VMEM((nv, B, tv), stash_dtype),   # exp(logits - running max) per tile
                pltpu.VMEM((nv, B, 1), jnp.float32),    # running-max snapshot per tile
                pltpu.VMEM((B, 1), jnp.float32),        # running max
                pltpu.VMEM((B, 1), jnp.float32),        # running sum of exp
            ],
        )
        return pl.pallas_call(
            kernel,
            grid_spec=grid_spec,
            out_shape=(
                jax.ShapeDtypeStruct((B, V), jnp.float32),
                jax.ShapeDtypeStruct((B, S), jnp.float32),
            ),
            compiler_params=pltpu.CompilerParams(
                dimension_semantics=("arbitrary", "arbitrary"),  # both axes reduce
                vmem_limit_bytes=int(vmem_limit),
            ),
        )(h, w_out, b, attn_last)

    try:
        return _run(True)
    except Exception:
        # Graceful fallback if deep pipelining (pl.Buffered) is rejected for
        # these block specs; identical kernel with default double-buffering.
        return _run(False)


def _reference(tokens, embeds, w_out, b_out, attn, temperature):
    """Pure-JAX reference mirroring the PyTorch EnsembleModel.forward_decoder.

    embeds / w_out are the same (bf16-stored) weights the kernel sees, so the
    check isolates kernel correctness from the intentional bf16 quantisation.
    """
    M = embeds.shape[0]
    last_tok = tokens[:, -1]
    inv_t = 1.0 / temperature
    log_probs = []
    avg_attn = None
    for i in range(M):
        hb = jnp.take(embeds[i], last_tok, axis=0)                   # (B, H) bf16
        hb = (hb * inv_t).astype(jnp.float32)
        wb = w_out[i].astype(jnp.float32)                            # (H, V)
        logits = hb @ wb + b_out[i].astype(jnp.float32) * inv_t      # (B, V)
        logp = jax.nn.log_softmax(logits, axis=-1)
        log_probs.append(logp)
        a = attn[i, :, -1, :].astype(jnp.float32)
        avg_attn = a if avg_attn is None else avg_attn + a
    stacked = jnp.stack(log_probs, axis=0)
    avg_probs = jax.scipy.special.logsumexp(stacked, axis=0) - math.log(M)
    return avg_probs, avg_attn / M


if __name__ == "__main__":
    key = jax.random.PRNGKey(0)
    M, B, T, H, V, S, VOCAB = 3, 8, 8, 128, 512, 128, 512
    temperature = 1.5

    k1, k2, k3, k4, k5 = jax.random.split(key, 5)
    tokens = jax.random.randint(k1, (B, T), 0, VOCAB, dtype=jnp.int32)
    embeds_f32 = jax.random.normal(k2, (M, VOCAB, H), dtype=jnp.float32) * 0.1
    w_out_f32 = jax.random.normal(k3, (M, H, V), dtype=jnp.float32) * 0.1
    b_out = jax.random.normal(k4, (M, 1, V), dtype=jnp.float32) * 0.1
    attn = jax.nn.softmax(
        jax.random.normal(k5, (M, B, T, S), dtype=jnp.float32), axis=-1)

    # One-time ("model load") cast of the ensemble weights to bf16: the wrapper
    # never converts per call, so the kernel reads 2 B/elem on the W stream.
    embeds = jax.block_until_ready(embeds_f32.astype(jnp.bfloat16))
    w_out = jax.block_until_ready(w_out_f32.astype(jnp.bfloat16))

    ref_probs, ref_attn = _reference(tokens, embeds, w_out, b_out, attn,
                                     temperature)

    # Config 1: tv=256 -> 2 vocab tiles, static-unroll finalize, f32 exp stash.
    avg_probs, avg_attn = ensemble_forward_decoder(
        tokens, embeds, w_out, b_out, attn, temperature=temperature, tv=256)
    avg_probs = jax.block_until_ready(avg_probs)
    avg_attn = jax.block_until_ready(avg_attn)
    assert jnp.allclose(avg_probs, ref_probs, atol=1e-4, rtol=1e-4), (
        float(jnp.max(jnp.abs(avg_probs - ref_probs))))
    assert jnp.allclose(avg_attn, ref_attn, atol=1e-5, rtol=1e-5), (
        float(jnp.max(jnp.abs(avg_attn - ref_attn))))

    # Config 2: tv=128 -> 4 tiles, fori-loop finalize, bf16 exp stash
    # (exercises the large-vocab / VMEM-constrained code path).
    avg_probs2, avg_attn2 = ensemble_forward_decoder(
        tokens, embeds, w_out, b_out, attn, temperature=temperature,
        tv=128, stash_dtype=jnp.bfloat16, unroll_finalize=False)
    avg_probs2 = jax.block_until_ready(avg_probs2)
    avg_attn2 = jax.block_until_ready(avg_attn2)
    assert jnp.allclose(avg_probs2, ref_probs, atol=5e-3, rtol=0.0), (
        float(jnp.max(jnp.abs(avg_probs2 - ref_probs))))
    assert jnp.allclose(avg_attn2, ref_attn, atol=1e-5, rtol=1e-5), (
        float(jnp.max(jnp.abs(avg_attn2 - ref_attn))))

    print("KERNEL_OK")
</pallas_src>

<mosaic_0001>
module attributes {stable_mosaic.version = 11 : i64} {
  func.func @_ensemble_decoder_kernel(%arg0: i32, %arg1: i32, %arg2: memref<1x8x128xbf16, #tpu.memory_space<vmem>>, %arg3: memref<1x128x256xbf16, #tpu.memory_space<vmem>>, %arg4: memref<1x1x256xf32, #tpu.memory_space<vmem>>, %arg5: memref<1x8x128xf32, #tpu.memory_space<vmem>>, %arg6: memref<8x512xf32, #tpu.memory_space<vmem>>, %arg7: memref<8x128xf32, #tpu.memory_space<vmem>>, %arg8: memref<2x8x256xf32, #tpu.memory_space<vmem>>, %arg9: memref<2x8x1xf32, #tpu.memory_space<vmem>>, %arg10: memref<8x1xf32, #tpu.memory_space<vmem>>, %arg11: memref<8x1xf32, #tpu.memory_space<vmem>>) attributes {dimension_semantics = [#tpu.dimension_semantics<arbitrary>, #tpu.dimension_semantics<arbitrary>], iteration_bounds = array<i64: 3, 2>, scalar_prefetch = 0 : i64, scratch_operands = 4 : i64, tpu.core_type = #tpu.core_type<tc>, window_params = [{transform_indices = @transform_0, window_bounds = array<i64: 1, 8, 128>}, {transform_indices = @transform_1, window_bounds = array<i64: 1, 128, 256>}, {transform_indices = @transform_2, window_bounds = array<i64: 1, 1, 256>}, {transform_indices = @transform_3, window_bounds = array<i64: 1, 8, 128>}, {pipeline_mode = #tpu.pipeline_mode<synchronous>, transform_indices = @transform_4, window_bounds = array<i64: 8, 512>}, {pipeline_mode = #tpu.pipeline_mode<synchronous>, transform_indices = @transform_5, window_bounds = array<i64: 8, 128>}]} {
    %c0_i32 = arith.constant 0 : i32
    %0 = arith.cmpi eq, %arg0, %c0_i32 : i32
    %c0_i32_0 = arith.constant 0 : i32
    %1 = arith.cmpi eq, %arg1, %c0_i32_0 : i32
    %2 = arith.andi %0, %1 : i1
    %3 = arith.extui %2 : i1 to i32
    %c0_i32_1 = arith.constant 0 : i32
    %4 = arith.cmpi ne, %3, %c0_i32_1 : i32
    scf.if %4 {
      %cst_32 = arith.constant 0.000000e+00 : f32
      %52 = vector.broadcast %cst_32 : f32 to vector<8x512xf32>
      %c0_33 = arith.constant 0 : index
      %c0_34 = arith.constant 0 : index
      %53 = vector.load %arg6[%c0_33, %c0_34] : memref<8x512xf32, #tpu.memory_space<vmem>>, vector<8x512xf32>
      tpu.vector_store %arg6[%c0_33, %c0_34], %52 {strides = array<i32>} : memref<8x512xf32, #tpu.memory_space<vmem>>, vector<8x512xf32>,
      %cst_35 = arith.constant 0.000000e+00 : f32
      %54 = vector.broadcast %cst_35 : f32 to vector<8x128xf32>
      %c0_36 = arith.constant 0 : index
      %c0_37 = arith.constant 0 : index
      %55 = vector.load %arg7[%c0_36, %c0_37] : memref<8x128xf32, #tpu.memory_space<vmem>>, vector<8x128xf32>
      tpu.vector_store %arg7[%c0_36, %c0_37], %54 {strides = array<i32>} : memref<8x128xf32, #tpu.memory_space<vmem>>, vector<8x128xf32>,
    } else {
    }
    %c0_i32_2 = arith.constant 0 : i32
    %5 = arith.cmpi eq, %arg1, %c0_i32_2 : i32
    %6 = arith.extui %5 : i1 to i32
    %c0_i32_3 = arith.constant 0 : i32
    %7 = arith.cmpi ne, %6, %c0_i32_3 : i32
    scf.if %7 {
      %cst_32 = arith.constant 0xFF800000 : f32
      %52 = vector.broadcast %cst_32 : f32 to vector<8x1xf32>
      %c0_33 = arith.constant 0 : index
      %c0_34 = arith.constant 0 : index
      %53 = vector.load %arg10[%c0_33, %c0_34] : memref<8x1xf32, #tpu.memory_space<vmem>>, vector<8x1xf32>
      tpu.vector_store %arg10[%c0_33, %c0_34], %52 {strides = array<i32>} : memref<8x1xf32, #tpu.memory_space<vmem>>, vector<8x1xf32>,
      %cst_35 = arith.constant 0.000000e+00 : f32
      %54 = vector.broadcast %cst_35 : f32 to vector<8x1xf32>
      %c0_36 = arith.constant 0 : index
      %c0_37 = arith.constant 0 : index
      %55 = vector.load %arg11[%c0_36, %c0_37] : memref<8x1xf32, #tpu.memory_space<vmem>>, vector<8x1xf32>
      tpu.vector_store %arg11[%c0_36, %c0_37], %54 {strides = array<i32>} : memref<8x1xf32, #tpu.memory_space<vmem>>, vector<8x1xf32>,
    } else {
    }
    %c0 = arith.constant 0 : index
    %c0_4 = arith.constant 0 : index
    %c0_5 = arith.constant 0 : index
    %8 = vector.load %arg2[%c0, %c0_4, %c0_5] : memref<1x8x128xbf16, #tpu.memory_space<vmem>>, vector<1x8x128xbf16>
    %9 = vector.shape_cast %8 : vector<1x8x128xbf16> to vector<8x128xbf16>
    %c0_6 = arith.constant 0 : index
    %c0_7 = arith.constant 0 : index
    %c0_8 = arith.constant 0 : index
    %10 = vector.load %arg3[%c0_6, %c0_7, %c0_8] : memref<1x128x256xbf16, #tpu.memory_space<vmem>>, vector<1x128x256xbf16>
    %11 = vector.shape_cast %10 : vector<1x128x256xbf16> to vector<128x256xbf16>
    %cst = arith.constant dense<0.000000e+00> : vector<8x256xf32>
    %12 = tpu.matmul %9, %11, %cst {dimension_numbers = #tpu.dot_dimension_numbers<[1], [0], [0], [1], [0, 0, 1, 1], [], []>} : vector<8x128xbf16>, vector<128x256xbf16>, vector<8x256xf32> -> vector<8x256xf32>
    %c0_9 = arith.constant 0 : index
    %c0_10 = arith.constant 0 : index
    %c0_11 = arith.constant 0 : index
    %13 = vector.load %arg4[%c0_9, %c0_10, %c0_11] : memref<1x1x256xf32, #tpu.memory_space<vmem>>, vector<1x1x256xf32>
    %14 = vector.shape_cast %13 : vector<1x1x256xf32> to vector<1x256xf32>
    %15 = vector.broadcast %14 : vector<1x256xf32> to vector<8x256xf32>
    %16 = arith.addf %12, %15 : vector<8x256xf32>
    %cst_12 = arith.constant dense<0xFF800000> : vector<8xf32>
    %17 = vector.multi_reduction <maximumf>, %16, %cst_12 [1] : vector<8x256xf32> to vector<8xf32>
    %18 = vector.shape_cast %17 : vector<8xf32> to vector<8x1xf32>
    %c0_13 = arith.constant 0 : index
    %c0_14 = arith.constant 0 : index
    %19 = vector.load %arg10[%c0_13, %c0_14] : memref<8x1xf32, #tpu.memory_space<vmem>>, vector<8x1xf32>
    %20 = arith.maximumf %19, %18 : vector<8x1xf32>
    %21 = vector.broadcast %20 : vector<8x1xf32> to vector<8x256xf32>
    %22 = arith.subf %16, %21 : vector<8x256xf32>
    %23 = math.exp %22 : vector<8x256xf32>
    %c0_15 = arith.constant 0 : index
    %c0_16 = arith.constant 0 : index
    %24 = vector.load %arg11[%c0_15, %c0_16] : memref<8x1xf32, #tpu.memory_space<vmem>>, vector<8x1xf32>
    %c0_17 = arith.constant 0 : index
    %c0_18 = arith.constant 0 : index
    %25 = vector.load %arg10[%c0_17, %c0_18] : memref<8x1xf32, #tpu.memory_space<vmem>>, vector<8x1xf32>
    %26 = arith.subf %25, %20 : vector<8x1xf32>
    %27 = math.exp %26 : vector<8x1xf32>
    %28 = arith.mulf %24, %27 : vector<8x1xf32>
    %cst_19 = arith.constant dense<0.000000e+00> : vector<8xf32>
    %29 = vector.multi_reduction <add>, %23, %cst_19 [1] : vector<8x256xf32> to vector<8xf32>
    %30 = vector.shape_cast %29 : vector<8xf32> to vector<8x1xf32>
    %31 = arith.addf %28, %30 : vector<8x1xf32>
    %c0_20 = arith.constant 0 : index
    %c0_21 = arith.constant 0 : index
    %32 = vector.load %arg11[%c0_20, %c0_21] : memref<8x1xf32, #tpu.memory_space<vmem>>, vector<8x1xf32>
    tpu.vector_store %arg11[%c0_20, %c0_21], %31 {strides = array<i32>} : memref<8x1xf32, #tpu.memory_space<vmem>>, vector<8x1xf32>,
    %c0_22 = arith.constant 0 : index
    %c0_23 = arith.constant 0 : index
    %33 = vector.load %arg10[%c0_22, %c0_23] : memref<8x1xf32, #tpu.memory_space<vmem>>, vector<8x1xf32>
    tpu.vector_store %arg10[%c0_22, %c0_23], %20 {strides = array<i32>} : memref<8x1xf32, #tpu.memory_space<vmem>>, vector<8x1xf32>,
    %34 = arith.index_cast %arg1 : i32 to index
    %c0_24 = arith.constant 0 : index
    %c0_25 = arith.constant 0 : index
    %35 = vector.load %arg8[%34, %c0_24, %c0_25] : memref<2x8x256xf32, #tpu.memory_space<vmem>>, vector<1x8x256xf32>
    %36 = vector.shape_cast %35 : vector<1x8x256xf32> to vector<8x256xf32>
    %37 = vector.shape_cast %23 : vector<8x256xf32> to vector<1x8x256xf32>
    tpu.vector_store %arg8[%34, %c0_24, %c0_25], %37 {strides = array<i32>} : memref<2x8x256xf32, #tpu.memory_space<vmem>>, vector<1x8x256xf32>,
    %38 = arith.index_cast %arg1 : i32 to index
    %c0_26 = arith.constant 0 : index
    %c0_27 = arith.constant 0 : index
    %39 = vector.load %arg9[%38, %c0_26, %c0_27] : memref<2x8x1xf32, #tpu.memory_space<vmem>>, vector<1x8x1xf32>
    %40 = vector.shape_cast %39 : vector<1x8x1xf32> to vector<8x1xf32>
    %41 = vector.shape_cast %20 : vector<8x1xf32> to vector<1x8x1xf32>
    tpu.vector_store %arg9[%38, %c0_26, %c0_27], %41 {strides = array<i32>} : memref<2x8x1xf32, #tpu.memory_space<vmem>>, vector<1x8x1xf32>,
    %c1_i32 = arith.constant 1 : i32
    %42 = arith.cmpi eq, %arg1, %c1_i32 : i32
    %c2_i32 = arith.constant 2 : i32
    %43 = arith.cmpi slt, %arg0, %c2_i32 : i32
    %44 = arith.andi %42, %43 : i1
    %45 = arith.extui %44 : i1 to i32
    %c0_i32_28 = arith.constant 0 : i32
    %46 = arith.cmpi ne, %45, %c0_i32_28 : i32
    scf.if %46 {
      %c0_32 = arith.constant 0 : index
      %c0_33 = arith.constant 0 : index
      %52 = vector.load %arg10[%c0_32, %c0_33] : memref<8x1xf32, #tpu.memory_space<vmem>>, vector<8x1xf32>
      %c0_34 = arith.constant 0 : index
      %c0_35 = arith.constant 0 : index
      %53 = vector.load %arg11[%c0_34, %c0_35] : memref<8x1xf32, #tpu.memory_space<vmem>>, vector<8x1xf32>
      %cst_36 = arith.constant 1.000000e+00 : f32
      %54 = vector.broadcast %cst_36 : f32 to vector<8x1xf32>
      %55 = arith.divf %54, %53 : vector<8x1xf32>
      %c0_37 = arith.constant 0 : index
      %c0_38 = arith.constant 0 : index
      %c0_39 = arith.constant 0 : index
      %56 = vector.load %arg9[%c0_37, %c0_38, %c0_39] : memref<2x8x1xf32, #tpu.memory_space<vmem>>, vector<1x8x1xf32>
      %57 = vector.shape_cast %56 : vector<1x8x1xf32> to vector<8x1xf32>
      %58 = arith.subf %57, %52 : vector<8x1xf32>
      %59 = math.exp %58 : vector<8x1xf32>
      %60 = arith.mulf %59, %55 : vector<8x1xf32>
      %c0_40 = arith.constant 0 : index
      %c0_41 = arith.constant 0 : index
      %61 = vector.load %arg6[%c0_40, %c0_41] : memref<8x512xf32, #tpu.memory_space<vmem>>, vector<8x256xf32>
      %c0_42 = arith.constant 0 : index
      %c0_43 = arith.constant 0 : index
      %c0_44 = arith.constant 0 : index
      %62 = vector.load %arg8[%c0_42, %c0_43, %c0_44] : memref<2x8x256xf32, #tpu.memory_space<vmem>>, vector<1x8x256xf32>
      %63 = vector.shape_cast %62 : vector<1x8x256xf32> to vector<8x256xf32>
      %64 = vector.broadcast %60 : vector<8x1xf32> to vector<8x256xf32>
      %65 = arith.mulf %63, %64 : vector<8x256xf32>
      %66 = arith.addf %61, %65 : vector<8x256xf32>
      %c0_45 = arith.constant 0 : index
      %c0_46 = arith.constant 0 : index
      %67 = vector.load %arg6[%c0_45, %c0_46] : memref<8x512xf32, #tpu.memory_space<vmem>>, vector<8x256xf32>
      tpu.vector_store %arg6[%c0_45, %c0_46], %66 {strides = array<i32>} : memref<8x512xf32, #tpu.memory_space<vmem>>, vector<8x256xf32>,
      %c1 = arith.constant 1 : index
      %c0_47 = arith.constant 0 : index
      %c0_48 = arith.constant 0 : index
      %68 = vector.load %arg9[%c1, %c0_47, %c0_48] : memref<2x8x1xf32, #tpu.memory_space<vmem>>, vector<1x8x1xf32>
      %69 = vector.shape_cast %68 : vector<1x8x1xf32> to vector<8x1xf32>
      %70 = arith.subf %69, %52 : vector<8x1xf32>
      %71 = math.exp %70 : vector<8x1xf32>
      %72 = arith.mulf %71, %55 : vector<8x1xf32>
      %c0_49 = arith.constant 0 : index
      %c256 = arith.constant 256 : index
      %73 = vector.load %arg6[%c0_49, %c256] : memref<8x512xf32, #tpu.memory_space<vmem>>, vector<8x256xf32>
      %c1_50 = arith.constant 1 : index
      %c0_51 = arith.constant 0 : index
      %c0_52 = arith.constant 0 : index
      %74 = vector.load %arg8[%c1_50, %c0_51, %c0_52] : memref<2x8x256xf32, #tpu.memory_space<vmem>>, vector<1x8x256xf32>
      %75 = vector.shape_cast %74 : vector<1x8x256xf32> to vector<8x256xf32>
      %76 = vector.broadcast %72 : vector<8x1xf32> to vector<8x256xf32>
      %77 = arith.mulf %75, %76 : vector<8x256xf32>
      %78 = arith.addf %73, %77 : vector<8x256xf32>
      %c0_53 = arith.constant 0 : index
      %c256_54 = arith.constant 256 : index
      %79 = vector.load %arg6[%c0_53, %c256_54] : memref<8x512xf32, #tpu.memory_space<vmem>>, vector<8x256xf32>
      tpu.vector_store %arg6[%c0_53, %c256_54], %78 {strides = array<i32>} : memref<8x512xf32, #tpu.memory_space<vmem>>, vector<8x256xf32>,
      %c0_55 = arith.constant 0 : index
      %c0_56 = arith.constant 0 : index
      %80 = vector.load %arg7[%c0_55, %c0_56] : memref<8x128xf32, #tpu.memory_space<vmem>>, vector<8x128xf32>
      %c0_57 = arith.constant 0 : index
      %c0_58 = arith.constant 0 : index
      %c0_59 = arith.constant 0 : index
      %81 = vector.load %arg5[%c0_57, %c0_58, %c0_59] : memref<1x8x128xf32, #tpu.memory_space<vmem>>, vector<1x8x128xf32>
      %82 = vector.shape_cast %81 : vector<1x8x128xf32> to vector<8x128xf32>
      %83 = arith.addf %80, %82 : vector<8x128xf32>
      %c0_60 = arith.constant 0 : index
      %c0_61 = arith.constant 0 : index
      %84 = vector.load %arg7[%c0_60, %c0_61] : memref<8x128xf32, #tpu.memory_space<vmem>>, vector<8x128xf32>
      tpu.vector_store %arg7[%c0_60, %c0_61], %83 {strides = array<i32>} : memref<8x128xf32, #tpu.memory_space<vmem>>, vector<8x128xf32>,
    } else {
    }
    %c1_i32_29 = arith.constant 1 : i32
    %47 = arith.cmpi eq, %arg1, %c1_i32_29 : i32
    %c2_i32_30 = arith.constant 2 : i32
    %48 = arith.cmpi eq, %arg0, %c2_i32_30 : i32
    %49 = arith.andi %47, %48 : i1
    %50 = arith.extui %49 : i1 to i32
    %c0_i32_31 = arith.constant 0 : i32
    %51 = arith.cmpi ne, %50, %c0_i32_31 : i32
    scf.if %51 {
      %c0_32 = arith.constant 0 : index
      %c0_33 = arith.constant 0 : index
      %52 = vector.load %arg10[%c0_32, %c0_33] : memref<8x1xf32, #tpu.memory_space<vmem>>, vector<8x1xf32>
      %c0_34 = arith.constant 0 : index
      %c0_35 = arith.constant 0 : index
      %53 = vector.load %arg11[%c0_34, %c0_35] : memref<8x1xf32, #tpu.memory_space<vmem>>, vector<8x1xf32>
      %cst_36 = arith.constant 1.000000e+00 : f32
      %54 = vector.broadcast %cst_36 : f32 to vector<8x1xf32>
      %55 = arith.divf %54, %53 : vector<8x1xf32>
      %c0_37 = arith.constant 0 : index
      %c0_38 = arith.constant 0 : index
      %c0_39 = arith.constant 0 : index
      %56 = vector.load %arg9[%c0_37, %c0_38, %c0_39] : memref<2x8x1xf32, #tpu.memory_space<vmem>>, vector<1x8x1xf32>
      %57 = vector.shape_cast %56 : vector<1x8x1xf32> to vector<8x1xf32>
      %58 = arith.subf %57, %52 : vector<8x1xf32>
      %59 = math.exp %58 : vector<8x1xf32>
      %60 = arith.mulf %59, %55 : vector<8x1xf32>
      %c0_40 = arith.constant 0 : index
      %c0_41 = arith.constant 0 : index
      %61 = vector.load %arg6[%c0_40, %c0_41] : memref<8x512xf32, #tpu.memory_space<vmem>>, vector<8x256xf32>
      %c0_42 = arith.constant 0 : index
      %c0_43 = arith.constant 0 : index
      %c0_44 = arith.constant 0 : index
      %62 = vector.load %arg8[%c0_42, %c0_43, %c0_44] : memref<2x8x256xf32, #tpu.memory_space<vmem>>, vector<1x8x256xf32>
      %63 = vector.shape_cast %62 : vector<1x8x256xf32> to vector<8x256xf32>
      %64 = vector.broadcast %60 : vector<8x1xf32> to vector<8x256xf32>
      %65 = arith.mulf %63, %64 : vector<8x256xf32>
      %66 = arith.addf %61, %65 : vector<8x256xf32>
      %cst_45 = arith.constant 1.17549435E-38 : f32
      %67 = vector.broadcast %cst_45 : f32 to vector<8x256xf32>
      %68 = arith.maximumf %66, %67 : vector<8x256xf32>
      %69 = math.log %68 : vector<8x256xf32>
      %cst_46 = arith.constant 1.09861231 : f32
      %70 = vector.broadcast %cst_46 : f32 to vector<8x256xf32>
      %71 = arith.subf %69, %70 : vector<8x256xf32>
      %c0_47 = arith.constant 0 : index
      %c0_48 = arith.constant 0 : index
      %72 = vector.load %arg6[%c0_47, %c0_48] : memref<8x512xf32, #tpu.memory_space<vmem>>, vector<8x256xf32>
      tpu.vector_store %arg6[%c0_47, %c0_48], %71 {strides = array<i32>} : memref<8x512xf32, #tpu.memory_space<vmem>>, vector<8x256xf32>,
      %c1 = arith.constant 1 : index
      %c0_49 = arith.constant 0 : index
      %c0_50 = arith.constant 0 : index
      %73 = vector.load %arg9[%c1, %c0_49, %c0_50] : memref<2x8x1xf32, #tpu.memory_space<vmem>>, vector<1x8x1xf32>
      %74 = vector.shape_cast %73 : vector<1x8x1xf32> to vector<8x1xf32>
      %75 = arith.subf %74, %52 : vector<8x1xf32>
      %76 = math.exp %75 : vector<8x1xf32>
      %77 = arith.mulf %76, %55 : vector<8x1xf32>
      %c0_51 = arith.constant 0 : index
      %c256 = arith.constant 256 : index
      %78 = vector.load %arg6[%c0_51, %c256] : memref<8x512xf32, #tpu.memory_space<vmem>>, vector<8x256xf32>
      %c1_52 = arith.constant 1 : index
      %c0_53 = arith.constant 0 : index
      %c0_54 = arith.constant 0 : index
      %79 = vector.load %arg8[%c1_52, %c0_53, %c0_54] : memref<2x8x256xf32, #tpu.memory_space<vmem>>, vector<1x8x256xf32>
      %80 = vector.shape_cast %79 : vector<1x8x256xf32> to vector<8x256xf32>
      %81 = vector.broadcast %77 : vector<8x1xf32> to vector<8x256xf32>
      %82 = arith.mulf %80, %81 : vector<8x256xf32>
      %83 = arith.addf %78, %82 : vector<8x256xf32>
      %cst_55 = arith.constant 1.17549435E-38 : f32
      %84 = vector.broadcast %cst_55 : f32 to vector<8x256xf32>
      %85 = arith.maximumf %83, %84 : vector<8x256xf32>
      %86 = math.log %85 : vector<8x256xf32>
      %cst_56 = arith.constant 1.09861231 : f32
      %87 = vector.broadcast %cst_56 : f32 to vector<8x256xf32>
      %88 = arith.subf %86, %87 : vector<8x256xf32>
      %c0_57 = arith.constant 0 : index
      %c256_58 = arith.constant 256 : index
      %89 = vector.load %arg6[%c0_57, %c256_58] : memref<8x512xf32, #tpu.memory_space<vmem>>, vector<8x256xf32>
      tpu.vector_store %arg6[%c0_57, %c256_58], %88 {strides = array<i32>} : memref<8x512xf32, #tpu.memory_space<vmem>>, vector<8x256xf32>,
      %c0_59 = arith.constant 0 : index
      %c0_60 = arith.constant 0 : index
      %90 = vector.load %arg7[%c0_59, %c0_60] : memref<8x128xf32, #tpu.memory_space<vmem>>, vector<8x128xf32>
      %c0_61 = arith.constant 0 : index
      %c0_62 = arith.constant 0 : index
      %c0_63 = arith.constant 0 : index
      %91 = vector.load %arg5[%c0_61, %c0_62, %c0_63] : memref<1x8x128xf32, #tpu.memory_space<vmem>>, vector<1x8x128xf32>
      %92 = vector.shape_cast %91 : vector<1x8x128xf32> to vector<8x128xf32>
      %93 = arith.addf %90, %92 : vector<8x128xf32>
      %cst_64 = arith.constant 0.333333343 : f32
      %94 = vector.broadcast %cst_64 : f32 to vector<8x128xf32>
      %95 = arith.mulf %93, %94 : vector<8x128xf32>
      %c0_65 = arith.constant 0 : index
      %c0_66 = arith.constant 0 : index
      %96 = vector.load %arg7[%c0_65, %c0_66] : memref<8x128xf32, #tpu.memory_space<vmem>>, vector<8x128xf32>
      tpu.vector_store %arg7[%c0_65, %c0_66], %95 {strides = array<i32>} : memref<8x128xf32, #tpu.memory_space<vmem>>, vector<8x128xf32>,
    } else {
    }
    return
  }
  func.func @transform_0(%arg0: i32, %arg1: i32) -> (i32, i32, i32) {
    %c0_i32 = arith.constant 0 : i32
    %c0_i32_0 = arith.constant 0 : i32
    %c0_i32_1 = arith.constant 0 : i32
    return %arg0, %c0_i32, %c0_i32_0 : i32, i32, i32
  }
  func.func @transform_1(%arg0: i32, %arg1: i32) -> (i32, i32, i32) {
    %c0_i32 = arith.constant 0 : i32
    %c0_i32_0 = arith.constant 0 : i32
    return %arg0, %c0_i32, %arg1 : i32, i32, i32
  }
  func.func @transform_2(%arg0: i32, %arg1: i32) -> (i32, i32, i32) {
    %c0_i32 = arith.constant 0 : i32
    %c0_i32_0 = arith.constant 0 : i32
    return %arg0, %c0_i32, %arg1 : i32, i32, i32
  }
  func.func @transform_3(%arg0: i32, %arg1: i32) -> (i32, i32, i32) {
    %c0_i32 = arith.constant 0 : i32
    %c0_i32_0 = arith.constant 0 : i32
    %c0_i32_1 = arith.constant 0 : i32
    return %arg0, %c0_i32, %c0_i32_0 : i32, i32, i32
  }
  func.func @transform_4(%arg0: i32, %arg1: i32) -> (i32, i32) {
    %c0_i32 = arith.constant 0 : i32
    %c0_i32_0 = arith.constant 0 : i32
    %c0_i32_1 = arith.constant 0 : i32
    return %c0_i32, %c0_i32_0 : i32, i32
  }
  func.func @transform_5(%arg0: i32, %arg1: i32) -> (i32, i32) {
    %c0_i32 = arith.constant 0 : i32
    %c0_i32_0 = arith.constant 0 : i32
    %c0_i32_1 = arith.constant 0 : i32
    return %c0_i32, %c0_i32_0 : i32, i32
  }
}

</mosaic_0001>

<llo_original>
// kernel: tpu_custom_call.1
$region0: #{tpu_custom_call.1}
  #allocation0 [shape = 'u32[]', space=smem, size = 0x4, offset = 0x4, fixed_abs, tag = 'smem constant byte address 0x4 - core index']
  #allocation1 [shape = 'u32[144,128]{1,0:T(1,128)}', space=vmem, size = 0x12000, scoped, tag = 'internal scratch']
  #allocation2 [shape = 'f32[2,8,256]{2,1,0:T(8,128)}', space=vmem, size = 0x4000, scoped, tag = 'scratch operand']
  #allocation3 [shape = 'f32[2,8,1]{2,1,0:T(8,128)}', space=vmem, size = 0x2000, scoped, tag = 'scratch operand']
  #allocation4 [shape = 'f32[8,1]{1,0:T(8,128)}', space=vmem, size = 0x1000, scoped, tag = 'scratch operand']
  #allocation5 [shape = 'f32[8,1]{1,0:T(8,128)}', space=vmem, size = 0x1000, scoped, tag = 'scratch operand']
  %s0 = inlined_call_operand.hbm [shape: bf16[3,8,128], index: 0, kind: input, shape index: {}]
  %s1 = inlined_call_operand.hbm [shape: bf16[3,128,512], index: 1, kind: input, shape index: {}]
  %s2 = inlined_call_operand.hbm [shape: f32[3,1,512], index: 2, kind: input, shape index: {}]
  %s3 = inlined_call_operand.hbm [shape: f32[3,8,128], index: 3, kind: input, shape index: {}]
  %s4 = inlined_call_operand.hbm [shape: f32[8,512], index: 4, kind: output, shape index: {0}]
  %s5 = inlined_call_operand.hbm [shape: f32[8,128], index: 5, kind: output, shape index: {1}]
  %6 = xla_tuple %s4, %s5
  %s7 = sld [smem:[#allocation0]]
  $region89: #{tpu_custom_call.1} parent=0
    _
  %s9 = ssub.s32 1, %s7
  %s10 = scalar_select 0, %s9, %s7
  $region1: #{tpu_custom_call.1} parent=0
    #allocation6 [shape = 'u8[4096]{0}', space=vmem, size = 0x1000, scoped, tag = 'input window, operand 0']
    #allocation7 [shape = 's32[2]{0}', space=sflag, size = 0x8, scoped, tag = 'scoped memory for tpu_custom_call.1']
    #allocation8 [shape = 's32[2]{0}', space=sflag, size = 0x8, scoped, tag = 'scoped memory for tpu_custom_call.1']
    #allocation9 [shape = 'u8[131072]{0}', space=vmem, size = 0x20000, scoped, tag = 'input window, operand 1']
    #allocation10 [shape = 's32[2]{0}', space=sflag, size = 0x8, scoped, tag = 'scoped memory for tpu_custom_call.1']
    #allocation11 [shape = 'u8[2048]{0}', space=vmem, size = 0x800, scoped, tag = 'input window, operand 2']
    #allocation12 [shape = 'u8[8192]{0}', space=vmem, size = 0x2000, scoped, tag = 'input window, operand 3']
    #allocation13 [shape = 's32[2]{0}', space=sflag, size = 0x8, scoped, tag = 'scoped memory for tpu_custom_call.1']
    #allocation14 [shape = 'u8[16384]{0}', space=vmem, size = 0x4000, scoped, tag = 'output window, operand 0, single buffered']
    #allocation15 [shape = 'u8[4096]{0}', space=vmem, size = 0x1000, scoped, tag = 'output window, operand 1, single buffered']
    #allocation16 [shape = 's32[1]{0}', space=sflag, size = 0x4, scoped, tag = 'scoped memory for tpu_custom_call.1']
    %11 = vsyncpa [#allocation7], 0
    %s12 = scalar_lea.sflag [#allocation7], 1
    %13 = vsyncpa %s12, 0
    %14 = vsyncpa [#allocation10], 0
    %s15 = scalar_lea.sflag [#allocation10], 1
    %16 = vsyncpa %s15, 0
    %17 = vsyncpa [#allocation13], 0
    %s18 = scalar_lea.sflag [#allocation13], 1
    %19 = vsyncpa %s18, 0
    %20 = vsyncpa [#allocation8], 0
    %21 = vsyncpa [#allocation16], 0
    loop: start=0, step=1, limit=8
    $region2: #{tpu_custom_call.1} parent=1 // loop_pre_header
      _
    $region3: #{tpu_custom_call.1} parent=1 // loop_header
      %s23 = sphi 0, %s27
      %p24 = scmp.ge.s32.totalorder %s23, 8
      %s30 = sphi 0, %s42
      %s31 = sphi 0, %s38
      %s32 = sphi 0, %s30
      %s33 = sphi 0, %s31
      %s34 = sphi 0, %s32
      %s35 = sphi 0, %s33
      %s45 = sphi 0, %s47
      %s48 = sphi 0, %s45
      %s49 = sphi 0, %s48
      %s65 = sphi 0, %s49
      %s73 = sphi 0, %s75
      %s76 = sphi 0, %s73
      %s77 = sphi 0, %s76
      %s93 = sphi 0, %s77
      %s101 = sphi 0, %s103
      %s104 = sphi 0, %s101
      %s105 = sphi 0, %s104
      %s121 = sphi 0, %s105
      %s127 = sphi 0, %s129
      %s130 = sphi 0, %s127
      %s131 = sphi 0, %s130
      %s147 = sphi 0, %s131
      %s151 = sphi 0, %s151
      %s153 = sphi 0, %s151
      %s154 = sphi 0, %s153
      %s168 = sphi 0, %s154
      %s172 = sphi 0, %s172
      %s174 = sphi 0, %s172
      %s175 = sphi 0, %s174
      %s189 = sphi 0, %s175
    $region4: #{tpu_custom_call.1} parent=1 // loop_header_branch
      %26 = sbr.rel (%p24) target = $region8
    $region5: #{tpu_custom_call.1} parent=1 // loop_body
      %s28 = ssub.s32 %s23, 1
      %s29 = ssub.s32 %s23, 2
      %s36 = sadd.s32 1, %s31
      %p37 = scmp.ge.s32.totalorder %s36, 2
      %s38 = scalar_select %p37, 0, %s36
      %s39 = sadd.s32 1, %s30
      %s40 = scalar_select %p37, %s39, %s30
      %p41 = scmp.ge.s32.totalorder %s40, 3
      %s42 = scalar_select %p41, 0, %s40
      %s43 = ssub.s32 %s30, %s42
      %p44 = scmp.eq.s32.totalorder %s43, 0
      %s46 = sadd.s32 %s45, 1
      %s47 = scalar_select %p44, %s45, %s46
      %p50 = pneg %p44
      %p51 = scmp.eq.s32.totalorder %s23, 5
      %p52 = por %p50, %p51
      %p53 = scmp.ne.s32.totalorder %s45, %s48
      %p54 = scmp.eq.s32.totalorder %s23, 0
      %p55 = por %p53, %p54
      %p56 = scmp.ne.s32.totalorder %s45, %s48
      %p57 = scmp.eq.s32.totalorder %s28, 5
      %p58 = por %p56, %p57
      %p59 = scmp.ne.s32.totalorder %s48, %s49
      %p60 = scmp.eq.s32.totalorder %s28, 0
      %p61 = por %p59, %p60
      %p62 = scmp.ne.s32.totalorder %s48, %s49
      %p63 = scmp.eq.s32.totalorder %s29, 5
      %p64 = por %p62, %p63
      %p66 = scmp.ne.s32.totalorder %s49, %s65
      %p67 = scmp.eq.s32.totalorder %s29, 0
      %p68 = por %p66, %p67
      %s69 = ssub.s32 %s30, %s42
      %s70 = ssub.s32 %s31, %s38
      %s71 = sor.u32 %s69, %s70
      %p72 = scmp.eq.s32.totalorder %s71, 0
      %s74 = sadd.s32 %s73, 1
      %s75 = scalar_select %p72, %s73, %s74
      %p78 = pneg %p72
      %p79 = scmp.eq.s32.totalorder %s23, 5
      %p80 = por %p78, %p79
      %p81 = scmp.ne.s32.totalorder %s73, %s76
      %p82 = scmp.eq.s32.totalorder %s23, 0
      %p83 = por %p81, %p82
      %p84 = scmp.ne.s32.totalorder %s73, %s76
      %p85 = scmp.eq.s32.totalorder %s28, 5
      %p86 = por %p84, %p85
      %p87 = scmp.ne.s32.totalorder %s76, %s77
      %p88 = scmp.eq.s32.totalorder %s28, 0
      %p89 = por %p87, %p88
      %p90 = scmp.ne.s32.totalorder %s76, %s77
      %p91 = scmp.eq.s32.totalorder %s29, 5
      %p92 = por %p90, %p91
      %p94 = scmp.ne.s32.totalorder %s77, %s93
      %p95 = scmp.eq.s32.totalorder %s29, 0
      %p96 = por %p94, %p95
      %s97 = ssub.s32 %s30, %s42
      %s98 = ssub.s32 %s31, %s38
      %s99 = sor.u32 %s97, %s98
      %p100 = scmp.eq.s32.totalorder %s99, 0
      %s102 = sadd.s32 %s101, 1
      %s103 = scalar_select %p100, %s101, %s102
      %p106 = pneg %p100
      %p107 = scmp.eq.s32.totalorder %s23, 5
      %p108 = por %p106, %p107
      %p109 = scmp.ne.s32.totalorder %s101, %s104
      %p110 = scmp.eq.s32.totalorder %s23, 0
      %p111 = por %p109, %p110
      %p112 = scmp.ne.s32.totalorder %s101, %s104
      %p113 = scmp.eq.s32.totalorder %s28, 5
      %p114 = por %p112, %p113
      %p115 = scmp.ne.s32.totalorder %s104, %s105
      %p116 = scmp.eq.s32.totalorder %s28, 0
      %p117 = por %p115, %p116
      %p118 = scmp.ne.s32.totalorder %s104, %s105
      %p119 = scmp.eq.s32.totalorder %s29, 5
      %p120 = por %p118, %p119
      %p122 = scmp.ne.s32.totalorder %s105, %s121
      %p123 = scmp.eq.s32.totalorder %s29, 0
      %p124 = por %p122, %p123
      %s125 = ssub.s32 %s30, %s42
      %p126 = scmp.eq.s32.totalorder %s125, 0
      %s128 = sadd.s32 %s127, 1
      %s129 = scalar_select %p126, %s127, %s128
      %p132 = pneg %p126
      %p133 = scmp.eq.s32.totalorder %s23, 5
      %p134 = por %p132, %p133
      %p135 = scmp.ne.s32.totalorder %s127, %s130
      %p136 = scmp.eq.s32.totalorder %s23, 0
      %p137 = por %p135, %p136
      %p138 = scmp.ne.s32.totalorder %s127, %s130
      %p139 = scmp.eq.s32.totalorder %s28, 5
      %p140 = por %p138, %p139
      %p141 = scmp.ne.s32.totalorder %s130, %s131
      %p142 = scmp.eq.s32.totalorder %s28, 0
      %p143 = por %p141, %p142
      %p144 = scmp.ne.s32.totalorder %s130, %s131
      %p145 = scmp.eq.s32.totalorder %s29, 5
      %p146 = por %p144, %p145
      %p148 = scmp.ne.s32.totalorder %s131, %s147
      %p149 = scmp.eq.s32.totalorder %s29, 0
      %p150 = por %p148, %p149
      %s152 = sadd.s32 %s151, 1
      %p155 = scmp.eq.s32.totalorder %s23, 5
      %p156 = scmp.ne.s32.totalorder %s151, %s153
      %p157 = scmp.eq.s32.totalorder %s23, 0
      %p158 = por %p156, %p157
      %p159 = scmp.ne.s32.totalorder %s151, %s153
      %p160 = scmp.eq.s32.totalorder %s28, 5
      %p161 = por %p159, %p160
      %p162 = scmp.ne.s32.totalorder %s153, %s154
      %p163 = scmp.eq.s32.totalorder %s28, 0
      %p164 = por %p162, %p163
      %p165 = scmp.ne.s32.totalorder %s153, %s154
      %p166 = scmp.eq.s32.totalorder %s29, 5
      %p167 = por %p165, %p166
      %p169 = scmp.ne.s32.totalorder %s154, %s168
      %p170 = scmp.eq.s32.totalorder %s29, 0
      %p171 = por %p169, %p170
      %s173 = sadd.s32 %s172, 1
      %p176 = scmp.eq.s32.totalorder %s23, 5
      %p177 = scmp.ne.s32.totalorder %s172, %s174
      %p178 = scmp.eq.s32.totalorder %s23, 0
      %p179 = por %p177, %p178
      %p180 = scmp.ne.s32.totalorder %s172, %s174
      %p181 = scmp.eq.s32.totalorder %s28, 5
      %p182 = por %p180, %p181
      %p183 = scmp.ne.s32.totalorder %s174, %s175
      %p184 = scmp.eq.s32.totalorder %s28, 0
      %p185 = por %p183, %p184
      %p186 = scmp.ne.s32.totalorder %s174, %s175
      %p187 = scmp.eq.s32.totalorder %s29, 5
      %p188 = por %p186, %p187
      %p190 = scmp.ne.s32.totalorder %s175, %s189
      %p191 = scmp.eq.s32.totalorder %s29, 0
      %p192 = por %p190, %p191
      %p193 = scmp.le.s32.totalorder 1, %s23
      %p194 = scmp.lt.s32.totalorder %s23, 7
      %p195 = pnand %p193, %p194
      %p196 = pneg %p195
      // Predicated region
      $region9: #{tpu_custom_call.1} parent=5 // pred_check
        _
      $region10: #{tpu_custom_call.1} parent=5 // pred_check_branch
        %198 = sbr.rel (%p195) target = $region12
      $region11: #{tpu_custom_call.1} parent=5 // pred_region
        %s199 = ssub.s32 %s23, 1
      $region12: #{tpu_custom_call.1} parent=5 // pred_fallthru
        _
      %p200 = scmp.lt.s32.totalorder %s23, 6
      // Predicated region
      $region13: #{tpu_custom_call.1} parent=5 // pred_check
        %p201 = pneg %p200
      $region14: #{tpu_custom_call.1} parent=5 // pred_check_branch
        %203 = sbr.rel (%p201) target = $region16
      $region15: #{tpu_custom_call.1} parent=5 // pred_region
        // Predicated region
        $region17: #{tpu_custom_call.1} parent=15 // pred_check
          %p204 = pneg %p55
        $region18: #{tpu_custom_call.1} parent=15 // pred_check_branch
          %206 = sbr.rel (%p204) target = $region20
        $region19: #{tpu_custom_call.1} parent=15 // pred_region
          %s207 = sand.u32 %s45, 1
          %s208 = scalar_lea.sflag [#allocation7], %s207
          %s209 = sand.u32 %s45, 1
          %s210 = smul.addr %s209, 4
          %s211 = scalar_lea.vmem [#allocation6], %s210
          %s213 = ssub.s32 64, 64
          %214 = vsyncadd %s208, %s213
          %s215 = smul.addr %s30, 64
          %s216 = scalar_lea.hbm %s0, %s215
          %s218 = sshll.u32 %s211, 4
          %s219 = int_to_ptr.vmem [resolvable:$true] %s218
          %221 = dma.hbm_to_vmem [thread:$0]  %s216, 64, %s219, %s208
        $region20: #{tpu_custom_call.1} parent=15 // pred_fallthru
          _
        // Predicated region
        $region21: #{tpu_custom_call.1} parent=15 // pred_check
          %p222 = pneg %p83
        $region22: #{tpu_custom_call.1} parent=15 // pred_check_branch
          %224 = sbr.rel (%p222) target = $region24
        $region23: #{tpu_custom_call.1} parent=15 // pred_region
          %s225 = sand.u32 %s23, 1
          %s226 = scalar_lea.sflag [#allocation10], %s225
          %s227 = sand.u32 %s73, 1
          %s228 = smul.addr %s227, 128
          %s229 = scalar_lea.vmem [#allocation9], %s228
          %s230 = smul.u32 2, %s31
          %s232 = ssub.s32 2048, 2048
          %233 = vsyncadd %s226, %s232
          %s234 = smul.addr %s30, 64
          %s235 = sadd.s32 %s230, %s234
          %s236 = smul.addr %s235, 64
          %s237 = scalar_lea.hbm %s1, %s236
          %s238 = sshll.u32 %s229, 4
          %s239 = int_to_ptr.vmem [resolvable:$true] %s238
          %244 = dma.hbm_to_vmem [thread:$0]  %s237, 2048, %s239, %s226, 256, 128, 8
        $region24: #{tpu_custom_call.1} parent=15 // pred_fallthru
          _
        // Predicated region
        $region25: #{tpu_custom_call.1} parent=15 // pred_check
          %p245 = pneg %p111
        $region26: #{tpu_custom_call.1} parent=15 // pred_check_branch
          %247 = sbr.rel (%p245) target = $region28
        $region27: #{tpu_custom_call.1} parent=15 // pred_region
          %s248 = sand.u32 %s23, 1
          %s249 = scalar_lea.sflag [#allocation10], %s248
          %s250 = sand.u32 %s101, 1
          %s251 = smul.addr %s250, 2
          %s252 = scalar_lea.vmem [#allocation11], %s251
          %s253 = smul.u32 2, %s31
          %s255 = ssub.s32 32, 32
          %256 = vsyncadd %s249, %s255
          %s257 = smul.addr %s30, 4
          %s258 = sadd.s32 %s253, %s257
          %s259 = smul.addr %s258, 16
          %s260 = scalar_lea.hbm %s2, %s259
          %s262 = sshll.u32 %s252, 4
          %s263 = int_to_ptr.vmem [resolvable:$true] %s262
          %265 = dma.hbm_to_vmem [thread:$0]  %s260, 32, %s263, %s249
        $region28: #{tpu_custom_call.1} parent=15 // pred_fallthru
          _
        // Predicated region
        $region29: #{tpu_custom_call.1} parent=15 // pred_check
          %p266 = pneg %p137
        $region30: #{tpu_custom_call.1} parent=15 // pred_check_branch
          %268 = sbr.rel (%p266) target = $region32
        $region31: #{tpu_custom_call.1} parent=15 // pred_region
          %s269 = sand.u32 %s127, 1
          %s270 = scalar_lea.sflag [#allocation13], %s269
          %s271 = sand.u32 %s127, 1
          %s272 = smul.addr %s271, 8
          %s273 = scalar_lea.vmem [#allocation12], %s272
          %s275 = ssub.s32 128, 128
          %276 = vsyncadd %s270, %s275
          %s277 = smul.addr %s30, 128
          %s278 = scalar_lea.hbm %s3, %s277
          %s280 = sshll.u32 %s273, 4
          %s281 = int_to_ptr.vmem [resolvable:$true] %s280
          %283 = dma.hbm_to_vmem [thread:$0]  %s278, 128, %s281, %s270
        $region32: #{tpu_custom_call.1} parent=15 // pred_fallthru
          _
      $region16: #{tpu_custom_call.1} parent=5 // pred_fallthru
        _
      %p284 = scmp.le.s32.totalorder 1, %s23
      %p285 = scmp.lt.s32.totalorder %s23, 7
      %p286 = pnand %p284, %p285
      %p287 = pneg %p286
      // Predicated region
      $region33: #{tpu_custom_call.1} parent=5 // pred_check
        _
      $region34: #{tpu_custom_call.1} parent=5 // pred_check_branch
        %289 = sbr.rel (%p286) target = $region36
      $region35: #{tpu_custom_call.1} parent=5 // pred_region
        %s290 = ssub.s32 %s23, 1
        %s291 = sand.u32 %s48, 1
        %s292 = scalar_lea.sflag [#allocation7], %s291
        %s293 = sand.u32 %s48, 1
        %s294 = smul.addr %s293, 4
        %s295 = scalar_lea.vmem [#allocation6], %s294
        // Predicated region
        $region37: #{tpu_custom_call.1} parent=35 // pred_check
          %p296 = pneg %p61
        $region38: #{tpu_custom_call.1} parent=35 // pred_check_branch
          %298 = sbr.rel (%p296) target = $region40
        $region39: #{tpu_custom_call.1} parent=35 // pred_region
          %299 = dma.done %s292, 64
        $region40: #{tpu_custom_call.1} parent=35 // pred_fallthru
          _
        %s300 = sand.u32 %s28, 1
        %s301 = scalar_lea.sflag [#allocation10], %s300
        %s302 = sand.u32 %s76, 1
        %s303 = smul.addr %s302, 128
        %s304 = scalar_lea.vmem [#allocation9], %s303
        // Predicated region
        $region41: #{tpu_custom_call.1} parent=35 // pred_check
          %p305 = pneg %p89
        $region42: #{tpu_custom_call.1} parent=35 // pred_check_branch
          %307 = sbr.rel (%p305) target = $region44
        $region43: #{tpu_custom_call.1} parent=35 // pred_region
          %308 = dma.done %s301, 2048
        $region44: #{tpu_custom_call.1} parent=35 // pred_fallthru
          _
        %s309 = sand.u32 %s28, 1
        %s310 = scalar_lea.sflag [#allocation10], %s309
        %s311 = sand.u32 %s104, 1
        %s312 = smul.addr %s311, 2
        %s313 = scalar_lea.vmem [#allocation11], %s312
        // Predicated region
        $region45: #{tpu_custom_call.1} parent=35 // pred_check
          %p314 = pneg %p117
        $region46: #{tpu_custom_call.1} parent=35 // pred_check_branch
          %316 = sbr.rel (%p314) target = $region48
        $region47: #{tpu_custom_call.1} parent=35 // pred_region
          %317 = dma.done %s310, 32
        $region48: #{tpu_custom_call.1} parent=35 // pred_fallthru
          _
        %s318 = sand.u32 %s130, 1
        %s319 = scalar_lea.sflag [#allocation13], %s318
        %s320 = sand.u32 %s130, 1
        %s321 = smul.addr %s320, 8
        %s322 = scalar_lea.vmem [#allocation12], %s321
        // Predicated region
        $region49: #{tpu_custom_call.1} parent=35 // pred_check
          %p323 = pneg %p143
        $region50: #{tpu_custom_call.1} parent=35 // pred_check_branch
          %325 = sbr.rel (%p323) target = $region52
        $region51: #{tpu_custom_call.1} parent=35 // pred_region
          %326 = dma.done %s319, 128
        $region52: #{tpu_custom_call.1} parent=35 // pred_fallthru
          _
        %s327 = sand.u32 %s48, 1
        %s328 = scalar_lea.sflag [#allocation7], %s327
        %s329 = sand.u32 %s48, 1
        %s330 = smul.addr %s329, 4
        %s331 = scalar_lea.vmem [#allocation6], %s330
        %p332 = pneg %p61
        %p333 = pneg %p58
        %s334 = sand.u32 %s28, 1
        %s335 = scalar_lea.sflag [#allocation10], %s334
        %s336 = sand.u32 %s76, 1
        %s337 = smul.addr %s336, 128
        %s338 = scalar_lea.vmem [#allocation9], %s337
        %p339 = pneg %p89
        %p340 = pneg %p86
        %s341 = sand.u32 %s28, 1
        %s342 = scalar_lea.sflag [#allocation10], %s341
        %s343 = sand.u32 %s104, 1
        %s344 = smul.addr %s343, 2
        %s345 = scalar_lea.vmem [#allocation11], %s344
        %p346 = pneg %p117
        %p347 = pneg %p114
        %s348 = sand.u32 %s130, 1
        %s349 = scalar_lea.sflag [#allocation13], %s348
        %s350 = sand.u32 %s130, 1
        %s351 = smul.addr %s350, 8
        %s352 = scalar_lea.vmem [#allocation12], %s351
        %p353 = pneg %p143
        %p354 = pneg %p140
        %p355 = pneg %p164
        %p356 = pneg %p161
        %p357 = pneg %p185
        %p358 = pneg %p182
        %s359 = smul.u32 2, %s33
        %s360 = smul.u32 2, %s33
        %p362 = scmp.eq.s32.totalorder %s32, 0
        %p363 = scmp.eq.s32.totalorder %s33, 0
        %p364 = pnand %p362, %p363
        %p365 = pneg %p364
        // Predicated region
        $region53: #{tpu_custom_call.1} parent=35 // pred_check
          _
        $region54: #{tpu_custom_call.1} parent=35 // pred_check_branch
          %367 = sbr.rel (%p364) target = $region56
        $region55: #{tpu_custom_call.1} parent=35 // pred_region
          %368 = vst [vmem:[#allocation14] sm:$0xff] 0.0
          %369 = vst [vmem:[#allocation14 + $0x8] sm:$0xff] 0.0
          %370 = vst [vmem:[#allocation14 + $0x10] sm:$0xff] 0.0
          %371 = vst [vmem:[#allocation14 + $0x18] sm:$0xff] 0.0
          %372 = vst [vmem:[#allocation15] sm:$0xff] 0.0
        $region56: #{tpu_custom_call.1} parent=35 // pred_fallthru
          _
        // Predicated region
        $region57: #{tpu_custom_call.1} parent=35 // pred_check
          %p373 = pneg %p363
        $region58: #{tpu_custom_call.1} parent=35 // pred_check_branch
          %375 = sbr.rel (%p373) target = $region60
        $region59: #{tpu_custom_call.1} parent=35 // pred_region
          %vm376 = vcmask 7168
          %377 = vst.msk [vmem:[#allocation4] sm:$0xff] %vm376, -inf
          %378 = vst.msk [vmem:[#allocation5] sm:$0xff] %vm376, 0.0
        $region60: #{tpu_custom_call.1} parent=35 // pred_fallthru
          _
        %v379 = vld [vmem:[%s295] sm:$0xf]
        %v380 = vld [vmem:[%s304] sm:$0xff]
        %v381 = vld [vmem:[%s304 + $0x8] sm:$0xff]
        %v382 = vld [vmem:[%s304 + $0x10] sm:$0xff]
        %v383 = vld [vmem:[%s304 + $0x18] sm:$0xff]
        %v384 = vld [vmem:[%s304 + $0x20] sm:$0xff]
        %v385 = vld [vmem:[%s304 + $0x28] sm:$0xff]
        %v386 = vld [vmem:[%s304 + $0x30] sm:$0xff]
        %v387 = vld [vmem:[%s304 + $0x38] sm:$0xff]
        %v388 = vld [vmem:[%s304 + $0x40] sm:$0xff]
        %v389 = vld [vmem:[%s304 + $0x48] sm:$0xff]
        %v390 = vld [vmem:[%s304 + $0x50] sm:$0xff]
        %v391 = vld [vmem:[%s304 + $0x58] sm:$0xff]
        %v392 = vld [vmem:[%s304 + $0x60] sm:$0xff]
        %v393 = vld [vmem:[%s304 + $0x68] sm:$0xff]
        %v394 = vld [vmem:[%s304 + $0x70] sm:$0xff]
        %v395 = vld [vmem:[%s304 + $0x78] sm:$0xff]
        %v396 = vld [vmem:[%s313] sm:$0x3]
        %v398 = vlaneseq
        %v399 = vshrl.u32 %v398, 7
        %v400 = vsub.s32 0, %v399
        %v401 = vrot.slane %v396, %v400
        %v402 = vlaneseq
        %v403 = vshrl.u32 %v402, 7
        %v404 = vsub.s32 1, %v403
        %v405 = vrot.slane %v396, %v404
        %v424 = vunpack.c.l.b16 %v380
        %v425 = vunpack.c.h.b16 %v380
        %v426 = vunpack.c.l.b16 %v381
        %v427 = vunpack.c.h.b16 %v381
        %v428 = vunpack.c.l.b16 %v382
        %v429 = vunpack.c.h.b16 %v382
        %v430 = vunpack.c.l.b16 %v383
        %v431 = vunpack.c.h.b16 %v383
        %v432 = vunpack.c.l.b16 %v384
        %v433 = vunpack.c.h.b16 %v384
        %v434 = vunpack.c.l.b16 %v385
        %v435 = vunpack.c.h.b16 %v385
        %v436 = vunpack.c.l.b16 %v386
        %v437 = vunpack.c.h.b16 %v386
        %v438 = vunpack.c.l.b16 %v387
        %v439 = vunpack.c.h.b16 %v387
        %v440 = vunpack.c.l.b16 %v388
        %v441 = vunpack.c.h.b16 %v388
        %v442 = vunpack.c.l.b16 %v389
        %v443 = vunpack.c.h.b16 %v389
        %v444 = vunpack.c.l.b16 %v390
        %v445 = vunpack.c.h.b16 %v390
        %v446 = vunpack.c.l.b16 %v391
        %v447 = vunpack.c.h.b16 %v391
        %v448 = vunpack.c.l.b16 %v392
        %v449 = vunpack.c.h.b16 %v392
        %v450 = vunpack.c.l.b16 %v393
        %v451 = vunpack.c.h.b16 %v393
        %v452 = vunpack.c.l.b16 %v394
        %v453 = vunpack.c.h.b16 %v394
        %v454 = vunpack.c.l.b16 %v395
        %v455 = vunpack.c.h.b16 %v395
        %v456 = vpack.c.b16 %v426, %v424
        %v457 = vpack.c.b16 %v427, %v425
        %v458 = vpack.c.b16 %v430, %v428
        %v459 = vpack.c.b16 %v431, %v429
        %v460 = vpack.c.b16 %v434, %v432
        %v461 = vpack.c.b16 %v435, %v433
        %v462 = vpack.c.b16 %v438, %v436
        %v463 = vpack.c.b16 %v439, %v437
        %v464 = vpack.c.b16 %v442, %v440
        %v465 = vpack.c.b16 %v443, %v441
        %v466 = vpack.c.b16 %v446, %v444
        %v467 = vpack.c.b16 %v447, %v445
        %v468 = vpack.c.b16 %v450, %v448
        %v469 = vpack.c.b16 %v451, %v449
        %v470 = vpack.c.b16 %v454, %v452
        %v471 = vpack.c.b16 %v455, %v453
        %488 = vmatprep.subr.bf16.mxu0 %v457
        %489 = vmatpush1.bf16.msra.mxu0 %v456
        %490 = vmatprep.subr.bf16.mxu0 %v459
        %491 = vmatpush1.bf16.msra.mxu0 %v458
        %492 = vmatprep.subr.bf16.mxu0 %v461
        %493 = vmatpush1.bf16.msra.mxu0 %v460
        %494 = vmatprep.subr.bf16.mxu0 %v463
        %495 = vmatpush1.bf16.msra.mxu0 %v462
        %496 = vmatprep.subr.bf16.mxu0 %v465
        %497 = vmatpush1.bf16.msra.mxu0 %v464
        %498 = vmatprep.subr.bf16.mxu0 %v467
        %499 = vmatpush1.bf16.msra.mxu0 %v466
        %500 = vmatprep.subr.bf16.mxu0 %v469
        %501 = vmatpush1.bf16.msra.mxu0 %v468
        %502 = vmatprep.subr.bf16.mxu0 %v471
        %503 = vmatpush1.bf16.msra.mxu0 %v470
        %504 = vmatprep.subr.bf16.mxu0 0
        %505 = vmatpush1.bf16.msra.mxu0 0
        %506 = vmatprep.subr.bf16.mxu0 0
        %507 = vmatpush1.bf16.msra.mxu0 0
        %508 = vmatprep.subr.bf16.mxu0 0
        %509 = vmatpush1.bf16.msra.mxu0 0
        %510 = vmatprep.subr.bf16.mxu0 0
        %511 = vmatpush1.bf16.msra.mxu0 0
        %512 = vmatprep.subr.bf16.mxu0 0
        %513 = vmatpush1.bf16.msra.mxu0 0
        %514 = vmatprep.subr.bf16.mxu0 0
        %515 = vmatpush1.bf16.msra.mxu0 0
        %516 = vmatprep.subr.bf16.mxu0 0
        %517 = vmatpush1.bf16.msra.mxu0 0
        %518 = vmatprep.subr.bf16.mxu0 0
        %519 = vmatpush1.bf16.msra.mxu0 0
        %520 = vmatprep.mubr.bf16.mxu0 0
        %521 = vmatmul.mubr.bf16.gmra.mrb[0].mxu0 %v379
        %v522 = vpop.f32.mrb[0].mxu0
        %v523 = vadd.f32 %v401, %v522
        %v524 = vpop.f32.mrb[0].mxu0
        %v525 = vadd.f32 %v405, %v524
        %v526 = vpop.f32.mrb[0].mxu0
        %v527 = vpop.f32.mrb[0].mxu0
        %528 = vdwg.mxu0
        %v529 = vmax.f32 %v523, %v525
        %530 = vmax.xlane.f32.xlu0 %v529
        %v531 = vpop.xlane.xlu0 %530
        %v532 = vld [vmem:[#allocation4] sm:$0xff]
        %v533 = vmax.f32 %v532, %v531
        %535 = vset.pattern.permute.xlu0 0
        %536 = vperm.xlu0 %535, %v533
        %v537 = vpop.permute.xlu0 %536
        %v539 = vsub.f32 %v523, %v537
        %v540 = vsub.f32 %v525, %v537
        %v541 = vmul.f32 %v539, 1.442695
        %v542 = vpow.pop %v541
        %v543 = vmul.f32 %v540, 1.442695
        %v544 = vpow.pop %v543
        %v545 = vld [vmem:[#allocation5] sm:$0xff]
        %v546 = vsub.f32 %v532, %v533
        %v547 = vmul.f32 %v546, 1.442695
        %v548 = vpow.pop %v547
        %v549 = vmul.f32 %v545, %v548
        %v550 = vadd.f32 %v542, %v544
        %551 = vadd.xlane.f32.xlu0 %v550
        %v552 = vpop.xlane.xlu0 %551
        %v553 = vadd.f32 %v549, %v552
        %vm554 = vcmask 7168
        %555 = vst.msk [vmem:[#allocation5] sm:$0xff] %vm554, %v553
        %556 = vst.msk [vmem:[#allocation4] sm:$0xff] %vm554, %v533
        %s557 = smul.u32 %s33, 2
        %s558 = smul.addr %s557, 8
        %s559 = scalar_lea.vmem [#allocation2], %s558
        %560 = vst [vmem:[%s559] sm:$0xff] %v542
        %561 = vst [vmem:[%s559 + $0x8] sm:$0xff] %v544
        %s562 = smul.u32 %s33, 8
        %s563 = scalar_lea.vmem [#allocation3], %s562
        %564 = vst.msk [vmem:[%s563] sm:$0xff] %vm554, %v533
        %p565 = scmp.eq.s32.totalorder %s33, 1
        %p566 = scmp.lt.s32.totalorder %s32, 2
        %p567 = pnand %p565, %p566
        %p568 = pneg %p567
        // Predicated region
        $region61: #{tpu_custom_call.1} parent=35 // pred_check
          _
        $region62: #{tpu_custom_call.1} parent=35 // pred_check_branch
          %570 = sbr.rel (%p567) target = $region64
        $region63: #{tpu_custom_call.1} parent=35 // pred_region
          %v571 = vld [vmem:[#allocation4] sm:$0xff]
          %v572 = vld [vmem:[#allocation5] sm:$0xff]
          %v573 = vrcp.pop %v572
          %v574 = vmul.f32 1.0, %v573
          %v575 = vld [vmem:[#allocation3] sm:$0xff]
          %v576 = vsub.f32 %v575, %v571
          %v577 = vmul.f32 %v576, 1.442695
          %v578 = vpow.pop %v577
          %v579 = vmul.f32 %v578, %v574
          %v580 = vld [vmem:[#allocation14] sm:$0xff]
          %v581 = vld [vmem:[#allocation14 + $0x8] sm:$0xff]
          %v582 = vld [vmem:[#allocation2] sm:$0xff]
          %v583 = vld [vmem:[#allocation2 + $0x8] sm:$0xff]
          %585 = vset.pattern.permute.xlu0 0
          %586 = vperm.xlu0 %585, %v579
          %v587 = vpop.permute.xlu0 %586
          %v589 = vmul.f32 %v582, %v587
          %v590 = vmul.f32 %v583, %v587
          %v591 = vadd.f32 %v580, %v589
          %v592 = vadd.f32 %v581, %v590
          %593 = vst [vmem:[#allocation14] sm:$0xff] %v591
          %594 = vst [vmem:[#allocation14 + $0x8] sm:$0xff] %v592
          %s595 = scalar_lea.vmem [#allocation3], 8
          %v596 = vld [vmem:[%s595] sm:$0xff]
          %v597 = vsub.f32 %v596, %v571
          %v598 = vmul.f32 %v597, 1.442695
          %v599 = vpow.pop %v598
          %v600 = vmul.f32 %v599, %v574
          %v601 = vld [vmem:[#allocation14 + $0x10] sm:$0xff]
          %v602 = vld [vmem:[#allocation14 + $0x18] sm:$0xff]
          %s603 = scalar_lea.vmem [#allocation2], 16
          %v604 = vld [vmem:[%s603] sm:$0xff]
          %v605 = vld [vmem:[%s603 + $0x8] sm:$0xff]
          %607 = vset.pattern.permute.xlu0 0
          %608 = vperm.xlu0 %607, %v600
          %v609 = vpop.permute.xlu0 %608
          %v611 = vmul.f32 %v604, %v609
          %v612 = vmul.f32 %v605, %v609
          %v613 = vadd.f32 %v601, %v611
          %v614 = vadd.f32 %v602, %v612
          %615 = vst [vmem:[#allocation14 + $0x10] sm:$0xff] %v613
          %616 = vst [vmem:[#allocation14 + $0x18] sm:$0xff] %v614
          %v617 = vld [vmem:[#allocation15] sm:$0xff]
          %v618 = vld [vmem:[%s322] sm:$0xff]
          %v619 = vadd.f32 %v617, %v618
          %620 = vst [vmem:[#allocation15] sm:$0xff] %v619
        $region64: #{tpu_custom_call.1} parent=35 // pred_fallthru
          _
        %p621 = scmp.eq.s32.totalorder %s32, 2
        %p622 = pnand %p565, %p621
        %p623 = pneg %p622
        // Predicated region
        $region65: #{tpu_custom_call.1} parent=35 // pred_check
          _
        $region66: #{tpu_custom_call.1} parent=35 // pred_check_branch
          %625 = sbr.rel (%p622) target = $region68
        $region67: #{tpu_custom_call.1} parent=35 // pred_region
          %v626 = vld [vmem:[#allocation4] sm:$0xff]
          %v627 = vld [vmem:[#allocation5] sm:$0xff]
          %v628 = vrcp.pop %v627
          %v629 = vmul.f32 1.0, %v628
          %v630 = vld [vmem:[#allocation3] sm:$0xff]
          %v631 = vsub.f32 %v630, %v626
          %v632 = vmul.f32 %v631, 1.442695
          %v633 = vpow.pop %v632
          %v634 = vmul.f32 %v633, %v629
          %v635 = vld [vmem:[#allocation14] sm:$0xff]
          %v636 = vld [vmem:[#allocation14 + $0x8] sm:$0xff]
          %v637 = vld [vmem:[#allocation2] sm:$0xff]
          %v638 = vld [vmem:[#allocation2 + $0x8] sm:$0xff]
          %640 = vset.pattern.permute.xlu0 0
          %641 = vperm.xlu0 %640, %v634
          %v642 = vpop.permute.xlu0 %641
          %v644 = vmul.f32 %v637, %v642
          %v645 = vmul.f32 %v638, %v642
          %v646 = vadd.f32 %v635, %v644
          %v647 = vadd.f32 %v636, %v645
          %v648 = vmax.f32 %v646, 1.1754944e-38
          %v649 = vmax.f32 %v647, 1.1754944e-38
          %v650 = vlog2.pop %v648
          %v651 = vmul.f32 %v650, 0.6931472
          %v652 = vlog2.pop %v649
          %v653 = vmul.f32 %v652, 0.6931472
          %v654 = vsub.f32 %v651, 1.0986123
          %v655 = vsub.f32 %v653, 1.0986123
          %656 = vst [vmem:[#allocation14] sm:$0xff] %v654
          %657 = vst [vmem:[#allocation14 + $0x8] sm:$0xff] %v655
          %s658 = scalar_lea.vmem [#allocation3], 8
          %v659 = vld [vmem:[%s658] sm:$0xff]
          %v660 = vsub.f32 %v659, %v626
          %v661 = vmul.f32 %v660, 1.442695
          %v662 = vpow.pop %v661
          %v663 = vmul.f32 %v662, %v629
          %v664 = vld [vmem:[#allocation14 + $0x10] sm:$0xff]
          %v665 = vld [vmem:[#allocation14 + $0x18] sm:$0xff]
          %s666 = scalar_lea.vmem [#allocation2], 16
          %v667 = vld [vmem:[%s666] sm:$0xff]
          %v668 = vld [vmem:[%s666 + $0x8] sm:$0xff]
          %670 = vset.pattern.permute.xlu0 0
          %671 = vperm.xlu0 %670, %v663
          %v672 = vpop.permute.xlu0 %671
          %v674 = vmul.f32 %v667, %v672
          %v675 = vmul.f32 %v668, %v672
          %v676 = vadd.f32 %v664, %v674
          %v677 = vadd.f32 %v665, %v675
          %v678 = vmax.f32 %v676, 1.1754944e-38
          %v679 = vmax.f32 %v677, 1.1754944e-38
          %v680 = vlog2.pop %v678
          %v681 = vmul.f32 %v680, 0.6931472
          %v682 = vlog2.pop %v679
          %v683 = vmul.f32 %v682, 0.6931472
          %v684 = vsub.f32 %v681, 1.0986123
          %v685 = vsub.f32 %v683, 1.0986123
          %686 = vst [vmem:[#allocation14 + $0x10] sm:$0xff] %v684
          %687 = vst [vmem:[#allocation14 + $0x18] sm:$0xff] %v685
          %v688 = vld [vmem:[#allocation15] sm:$0xff]
          %v689 = vld [vmem:[%s322] sm:$0xff]
          %v690 = vadd.f32 %v688, %v689
          %v691 = vmul.f32 %v690, 0.33333334
          %692 = vst [vmem:[#allocation15] sm:$0xff] %v691
        $region68: #{tpu_custom_call.1} parent=35 // pred_fallthru
          _
        // Predicated region
        $region69: #{tpu_custom_call.1} parent=35 // pred_check
          %p693 = pneg %p161
        $region70: #{tpu_custom_call.1} parent=35 // pred_check_branch
          %695 = sbr.rel (%p693) target = $region72
        $region71: #{tpu_custom_call.1} parent=35 // pred_region
          %s697 = ssub.s32 512, 512
          %698 = vsyncadd [#allocation8], %s697
          %s700 = sshll.u32 [#allocation14], 4
          %s701 = int_to_ptr.vmem [resolvable:$true] %s700
          %703 = dma.vmem_to_hbm [thread:$0]  %s701, 512, %s4, [#allocation8]
        $region72: #{tpu_custom_call.1} parent=35 // pred_fallthru
          _
        // Predicated region
        $region73: #{tpu_custom_call.1} parent=35 // pred_check
          %p704 = pneg %p182
        $region74: #{tpu_custom_call.1} parent=35 // pred_check_branch
          %706 = sbr.rel (%p704) target = $region76
        $region75: #{tpu_custom_call.1} parent=35 // pred_region
          %s708 = ssub.s32 128, 128
          %709 = vsyncadd [#allocation16], %s708
          %s711 = sshll.u32 [#allocation15], 4
          %s712 = int_to_ptr.vmem [resolvable:$true] %s711
          %714 = dma.vmem_to_hbm [thread:$0]  %s712, 128, %s5, [#allocation16]
        $region76: #{tpu_custom_call.1} parent=35 // pred_fallthru
          _
        // Predicated region
        $region77: #{tpu_custom_call.1} parent=35 // pred_check
          %p715 = pneg %p161
        $region78: #{tpu_custom_call.1} parent=35 // pred_check_branch
          %717 = sbr.rel (%p715) target = $region80
        $region79: #{tpu_custom_call.1} parent=35 // pred_region
          %718 = dma.done [#allocation8], 512
        $region80: #{tpu_custom_call.1} parent=35 // pred_fallthru
          _
        // Predicated region
        $region81: #{tpu_custom_call.1} parent=35 // pred_check
          %p719 = pneg %p182
        $region82: #{tpu_custom_call.1} parent=35 // pred_check_branch
          %721 = sbr.rel (%p719) target = $region84
        $region83: #{tpu_custom_call.1} parent=35 // pred_region
          %722 = dma.done [#allocation16], 128
        $region84: #{tpu_custom_call.1} parent=35 // pred_fallthru
          _
      $region36: #{tpu_custom_call.1} parent=5 // pred_fallthru
        _
      %p723 = scmp.le.s32.totalorder 2, %s23
      // Predicated region
      $region85: #{tpu_custom_call.1} parent=5 // pred_check
        %p724 = pneg %p723
      $region86: #{tpu_custom_call.1} parent=5 // pred_check_branch
        %726 = sbr.rel (%p724) target = $region88
      $region87: #{tpu_custom_call.1} parent=5 // pred_region
        %s727 = ssub.s32 %s23, 2
      $region88: #{tpu_custom_call.1} parent=5 // pred_fallthru
        _
    $region6: #{tpu_custom_call.1} parent=1 // loop_footer
      %s27 = sadd.s32 1, %s23
    $region7: #{tpu_custom_call.1} parent=1 // loop_footer_branch
      %22 = sbr.rel target = $region3
    $region8: #{tpu_custom_call.1} parent=1 // loop_exit
      _
    %728 = vsyncpa [#allocation7], 1
    %s729 = scalar_lea.sflag [#allocation7], 1
    %730 = vsyncpa %s729, 1
    %731 = vsyncpa [#allocation10], 1
    %s732 = scalar_lea.sflag [#allocation10], 1
    %733 = vsyncpa %s732, 1
    %734 = vsyncpa [#allocation13], 1
    %s735 = scalar_lea.sflag [#allocation13], 1
    %736 = vsyncpa %s735, 1
    %737 = vsyncpa [#allocation8], 1
    %s738 = scalar_lea.sflag [#allocation8], 1
    %739 = vsyncpa %s738, 1
    %740 = vsyncpa [#allocation16], 1

</llo_original>
